<compile_context>
chip_gen: v7x
topology: tpu7x:2x2x1
jax: 0.10.0
libtpu: 0.0.40
codegen_flags: <defaults>
</compile_context>

<pallas_src>
import jax
import jax.numpy as jnp
from jax.experimental import pallas as pl
from jax.experimental.pallas import tpu as pltpu

KH, KW = 3, 3


def relu_conv2d_kernel(x_ref, w_ref, o_ref):
    # x_ref: (1, KW, Hp, Wo, Cin)  f32  — kw-shifted, zero-padded input slabs (VMEM)
    # w_ref: (KH, KW, Cin, Cpad)   bf16 — conv weights, Cout zero-padded to Cpad (VMEM)
    # o_ref: (1, H, Wo, Cpad)      f32  — output tile (VMEM), lane-dense last dim
    _, H, Wo, Cpad = o_ref.shape
    Cin = x_ref.shape[-1]

    acc = jnp.zeros((H * Wo, Cpad), jnp.float32)
    for kw in range(KW):
        # ReLU once per stored element (f32 VPU), then cast to bf16 for the MXU.
        # Each slab is (Hp, Wo, Cin) with (Wo, Cin) = (8, 128): tile-aligned.
        slab = jnp.maximum(x_ref[0, kw], 0.0).astype(jnp.bfloat16)
        for kh in range(KH):
            # Leading-axis slice + layout-exact reshape: no relayout copies.
            lhs = slab[kh:kh + H].reshape(H * Wo, Cin)            # (H*Wo, Cin) bf16
            acc = acc + jnp.dot(lhs, w_ref[kh, kw],
                                preferred_element_type=jnp.float32)
    o_ref[0] = acc.reshape(H, Wo, Cpad).astype(o_ref.dtype)


def _relu_conv2d_impl(x_nchw, w_oihw):
    """x_nchw: (N, Cin, H, W) f32 ; w_oihw: (Cout, Cin, KH, KW) f32
    Returns (N, Cout, H, W) f32 — same semantics as ReLU -> Conv2d(3x3, pad=1, stride=1)."""
    N, Cin, H, W = x_nchw.shape
    Cout = w_oihw.shape[0]

    Wo = max(8, ((W + 7) // 8) * 8)          # sublane-aligned output width
    Hp = H + 2                               # padded height (true conv padding)
    Wp = Wo + KW - 1                         # padded width needed for Wo output cols
    pad_right = Wp - W - 1                   # left pad = 1 (true conv pad), rest right
    Cpad = max(128, ((Cout + 127) // 128) * 128)   # lane-dense output channels

    # Layout plumbing (fused by XLA under jit): NCHW -> NHWC, spatial zero-pad,
    # then hoist the kw shift: 3 tile-aligned slabs, each (N, Hp, Wo, Cin).
    x_nhwc = jnp.transpose(x_nchw, (0, 2, 3, 1))
    x_pad = jnp.pad(x_nhwc, ((0, 0), (1, 1), (1, pad_right), (0, 0)))
    x_shift = jnp.stack([x_pad[:, :, kw:kw + Wo, :] for kw in range(KW)], axis=1)
    # x_shift: (N, KW, Hp, Wo, Cin)

    # OIHW -> (KH, KW, Cin, Cout), zero-pad Cout -> Cpad, cast to bf16 (native MXU).
    w_hwio = jnp.transpose(w_oihw, (2, 3, 1, 0))
    w_pad = jnp.pad(w_hwio, ((0, 0), (0, 0), (0, 0), (0, Cpad - Cout)))
    w_pad = w_pad.astype(jnp.bfloat16)

    flops = 2 * N * (H * Wo) * (KH * KW * Cin) * Cpad
    bytes_accessed = (N * KW * Hp * Wo * Cin * 4          # shifted input slabs (f32)
                      + KH * KW * Cin * Cpad * 2          # weights (bf16)
                      + N * H * Wo * Cpad * 4)            # output (f32)

    out_nhwc = pl.pallas_call(
        relu_conv2d_kernel,
        out_shape=jax.ShapeDtypeStruct((N, H, Wo, Cpad), x_nchw.dtype),
        grid_spec=pltpu.PrefetchScalarGridSpec(
            num_scalar_prefetch=0,
            grid=(N,),
            in_specs=[
                pl.BlockSpec((1, KW, Hp, Wo, Cin), lambda n: (n, 0, 0, 0, 0)),
                pl.BlockSpec((KH, KW, Cin, Cpad), lambda n: (0, 0, 0, 0)),
            ],
            out_specs=pl.BlockSpec((1, H, Wo, Cpad), lambda n: (n, 0, 0, 0)),
        ),
        compiler_params=pltpu.CompilerParams(
            dimension_semantics=("parallel",),
        ),
        cost_estimate=pl.CostEstimate(
            flops=flops, transcendentals=0, bytes_accessed=bytes_accessed),
    )(x_shift, w_pad)

    # Drop the width / channel padding, back to PyTorch NCHW.
    return jnp.transpose(out_nhwc[:, :, :W, :Cout], (0, 3, 1, 2))


relu_conv2d = jax.jit(_relu_conv2d_impl)


if __name__ == "__main__":
    key = jax.random.PRNGKey(0)
    kx, kw = jax.random.split(key)

    # Shapes implied by the module: x in (1, 128, 7, 7), weight (32, 128, 3, 3).
    N, Cin, H, W = 1, 128, 7, 7
    Cout = 32

    x = jax.random.normal(kx, (N, Cin, H, W), dtype=jnp.float32)
    # Deterministic synthetic weight init (Kaiming-uniform-ish scale).
    fan_in = Cin * KH * KW
    bound = 1.0 / jnp.sqrt(fan_in)
    w = jax.random.uniform(kw, (Cout, Cin, KH, KW), dtype=jnp.float32,
                           minval=-bound, maxval=bound)

    out = relu_conv2d(x, w)
    out = jax.block_until_ready(out)

    # Reference check against XLA's conv (ReLU then 3x3 same-pad conv).
    ref = jax.lax.conv_general_dilated(
        jnp.maximum(x, 0.0), w,
        window_strides=(1, 1), padding=((1, 1), (1, 1)),
        dimension_numbers=("NCHW", "OIHW", "NCHW"),
    )
    assert out.shape == (N, Cout, H, W)
    # bf16 MXU inputs (f32 accumulation) -> loosened tolerance vs the f32 reference.
    assert jnp.allclose(out, ref, atol=2e-2, rtol=2e-2)

    print("KERNEL_OK")
</pallas_src>

<mosaic_0001>
module attributes {stable_mosaic.version = 11 : i64} {
  func.func @relu_conv2d_kernel(%arg0: i32, %arg1: memref<1x3x9x8x128xf32, #tpu.memory_space<vmem>>, %arg2: memref<3x3x128x128xbf16, #tpu.memory_space<vmem>>, %arg3: memref<1x7x8x128xf32, #tpu.memory_space<vmem>>) attributes {dimension_semantics = [#tpu.dimension_semantics<parallel>], iteration_bounds = array<i64: 1>, scalar_prefetch = 0 : i64, scratch_operands = 0 : i64, tpu.core_type = #tpu.core_type<tc>, window_params = [{transform_indices = @transform_0, window_bounds = array<i64: 1, 3, 9, 8, 128>}, {pipeline_mode = #tpu.pipeline_mode<synchronous>, transform_indices = @transform_1, window_bounds = array<i64: 3, 3, 128, 128>}, {transform_indices = @transform_2, window_bounds = array<i64: 1, 7, 8, 128>}]} {
    %cst = arith.constant 0.000000e+00 : f32
    %0 = vector.broadcast %cst : f32 to vector<56x128xf32>
    %c0 = arith.constant 0 : index
    %c0_0 = arith.constant 0 : index
    %c0_1 = arith.constant 0 : index
    %c0_2 = arith.constant 0 : index
    %c0_3 = arith.constant 0 : index
    %1 = vector.load %arg1[%c0, %c0_0, %c0_1, %c0_2, %c0_3] : memref<1x3x9x8x128xf32, #tpu.memory_space<vmem>>, vector<1x1x9x8x128xf32>
    %2 = vector.shape_cast %1 : vector<1x1x9x8x128xf32> to vector<9x8x128xf32>
    %cst_4 = arith.constant 0.000000e+00 : f32
    %3 = vector.broadcast %cst_4 : f32 to vector<9x8x128xf32>
    %4 = arith.maximumf %2, %3 : vector<9x8x128xf32>
    %5 = arith.truncf %4 : vector<9x8x128xf32> to vector<9x8x128xbf16>
    %6 = vector.extract_strided_slice %5 {offsets = [0, 0, 0], sizes = [7, 8, 128], strides = [1, 1, 1]} : vector<9x8x128xbf16> to vector<7x8x128xbf16>
    %7 = vector.shape_cast %6 : vector<7x8x128xbf16> to vector<56x128xbf16>
    %c0_5 = arith.constant 0 : index
    %c0_6 = arith.constant 0 : index
    %c0_7 = arith.constant 0 : index
    %c0_8 = arith.constant 0 : index
    %8 = vector.load %arg2[%c0_5, %c0_6, %c0_7, %c0_8] : memref<3x3x128x128xbf16, #tpu.memory_space<vmem>>, vector<1x1x128x128xbf16>
    %9 = vector.shape_cast %8 : vector<1x1x128x128xbf16> to vector<128x128xbf16>
    %cst_9 = arith.constant dense<0.000000e+00> : vector<56x128xf32>
    %10 = tpu.matmul %7, %9, %cst_9 {dimension_numbers = #tpu.dot_dimension_numbers<[1], [0], [0], [1], [0, 0, 1, 1], [], []>} : vector<56x128xbf16>, vector<128x128xbf16>, vector<56x128xf32> -> vector<56x128xf32>
    %11 = arith.addf %0, %10 : vector<56x128xf32>
    %12 = vector.extract_strided_slice %5 {offsets = [1, 0, 0], sizes = [7, 8, 128], strides = [1, 1, 1]} : vector<9x8x128xbf16> to vector<7x8x128xbf16>
    %13 = vector.shape_cast %12 : vector<7x8x128xbf16> to vector<56x128xbf16>
    %c1 = arith.constant 1 : index
    %c0_10 = arith.constant 0 : index
    %c0_11 = arith.constant 0 : index
    %c0_12 = arith.constant 0 : index
    %14 = vector.load %arg2[%c1, %c0_10, %c0_11, %c0_12] : memref<3x3x128x128xbf16, #tpu.memory_space<vmem>>, vector<1x1x128x128xbf16>
    %15 = vector.shape_cast %14 : vector<1x1x128x128xbf16> to vector<128x128xbf16>
    %cst_13 = arith.constant dense<0.000000e+00> : vector<56x128xf32>
    %16 = tpu.matmul %13, %15, %cst_13 {dimension_numbers = #tpu.dot_dimension_numbers<[1], [0], [0], [1], [0, 0, 1, 1], [], []>} : vector<56x128xbf16>, vector<128x128xbf16>, vector<56x128xf32> -> vector<56x128xf32>
    %17 = arith.addf %11, %16 : vector<56x128xf32>
    %18 = vector.extract_strided_slice %5 {offsets = [2, 0, 0], sizes = [7, 8, 128], strides = [1, 1, 1]} : vector<9x8x128xbf16> to vector<7x8x128xbf16>
    %19 = vector.shape_cast %18 : vector<7x8x128xbf16> to vector<56x128xbf16>
    %c2 = arith.constant 2 : index
    %c0_14 = arith.constant 0 : index
    %c0_15 = arith.constant 0 : index
    %c0_16 = arith.constant 0 : index
    %20 = vector.load %arg2[%c2, %c0_14, %c0_15, %c0_16] : memref<3x3x128x128xbf16, #tpu.memory_space<vmem>>, vector<1x1x128x128xbf16>
    %21 = vector.shape_cast %20 : vector<1x1x128x128xbf16> to vector<128x128xbf16>
    %cst_17 = arith.constant dense<0.000000e+00> : vector<56x128xf32>
    %22 = tpu.matmul %19, %21, %cst_17 {dimension_numbers = #tpu.dot_dimension_numbers<[1], [0], [0], [1], [0, 0, 1, 1], [], []>} : vector<56x128xbf16>, vector<128x128xbf16>, vector<56x128xf32> -> vector<56x128xf32>
    %23 = arith.addf %17, %22 : vector<56x128xf32>
    %c0_18 = arith.constant 0 : index
    %c1_19 = arith.constant 1 : index
    %c0_20 = arith.constant 0 : index
    %c0_21 = arith.constant 0 : index
    %c0_22 = arith.constant 0 : index
    %24 = vector.load %arg1[%c0_18, %c1_19, %c0_20, %c0_21, %c0_22] : memref<1x3x9x8x128xf32, #tpu.memory_space<vmem>>, vector<1x1x9x8x128xf32>
    %25 = vector.shape_cast %24 : vector<1x1x9x8x128xf32> to vector<9x8x128xf32>
    %cst_23 = arith.constant 0.000000e+00 : f32
    %26 = vector.broadcast %cst_23 : f32 to vector<9x8x128xf32>
    %27 = arith.maximumf %25, %26 : vector<9x8x128xf32>
    %28 = arith.truncf %27 : vector<9x8x128xf32> to vector<9x8x128xbf16>
    %29 = vector.extract_strided_slice %28 {offsets = [0, 0, 0], sizes = [7, 8, 128], strides = [1, 1, 1]} : vector<9x8x128xbf16> to vector<7x8x128xbf16>
    %30 = vector.shape_cast %29 : vector<7x8x128xbf16> to vector<56x128xbf16>
    %c0_24 = arith.constant 0 : index
    %c1_25 = arith.constant 1 : index
    %c0_26 = arith.constant 0 : index
    %c0_27 = arith.constant 0 : index
    %31 = vector.load %arg2[%c0_24, %c1_25, %c0_26, %c0_27] : memref<3x3x128x128xbf16, #tpu.memory_space<vmem>>, vector<1x1x128x128xbf16>
    %32 = vector.shape_cast %31 : vector<1x1x128x128xbf16> to vector<128x128xbf16>
    %cst_28 = arith.constant dense<0.000000e+00> : vector<56x128xf32>
    %33 = tpu.matmul %30, %32, %cst_28 {dimension_numbers = #tpu.dot_dimension_numbers<[1], [0], [0], [1], [0, 0, 1, 1], [], []>} : vector<56x128xbf16>, vector<128x128xbf16>, vector<56x128xf32> -> vector<56x128xf32>
    %34 = arith.addf %23, %33 : vector<56x128xf32>
    %35 = vector.extract_strided_slice %28 {offsets = [1, 0, 0], sizes = [7, 8, 128], strides = [1, 1, 1]} : vector<9x8x128xbf16> to vector<7x8x128xbf16>
    %36 = vector.shape_cast %35 : vector<7x8x128xbf16> to vector<56x128xbf16>
    %c1_29 = arith.constant 1 : index
    %c1_30 = arith.constant 1 : index
    %c0_31 = arith.constant 0 : index
    %c0_32 = arith.constant 0 : index
    %37 = vector.load %arg2[%c1_29, %c1_30, %c0_31, %c0_32] : memref<3x3x128x128xbf16, #tpu.memory_space<vmem>>, vector<1x1x128x128xbf16>
    %38 = vector.shape_cast %37 : vector<1x1x128x128xbf16> to vector<128x128xbf16>
    %cst_33 = arith.constant dense<0.000000e+00> : vector<56x128xf32>
    %39 = tpu.matmul %36, %38, %cst_33 {dimension_numbers = #tpu.dot_dimension_numbers<[1], [0], [0], [1], [0, 0, 1, 1], [], []>} : vector<56x128xbf16>, vector<128x128xbf16>, vector<56x128xf32> -> vector<56x128xf32>
    %40 = arith.addf %34, %39 : vector<56x128xf32>
    %41 = vector.extract_strided_slice %28 {offsets = [2, 0, 0], sizes = [7, 8, 128], strides = [1, 1, 1]} : vector<9x8x128xbf16> to vector<7x8x128xbf16>
    %42 = vector.shape_cast %41 : vector<7x8x128xbf16> to vector<56x128xbf16>
    %c2_34 = arith.constant 2 : index
    %c1_35 = arith.constant 1 : index
    %c0_36 = arith.constant 0 : index
    %c0_37 = arith.constant 0 : index
    %43 = vector.load %arg2[%c2_34, %c1_35, %c0_36, %c0_37] : memref<3x3x128x128xbf16, #tpu.memory_space<vmem>>, vector<1x1x128x128xbf16>
    %44 = vector.shape_cast %43 : vector<1x1x128x128xbf16> to vector<128x128xbf16>
    %cst_38 = arith.constant dense<0.000000e+00> : vector<56x128xf32>
    %45 = tpu.matmul %42, %44, %cst_38 {dimension_numbers = #tpu.dot_dimension_numbers<[1], [0], [0], [1], [0, 0, 1, 1], [], []>} : vector<56x128xbf16>, vector<128x128xbf16>, vector<56x128xf32> -> vector<56x128xf32>
    %46 = arith.addf %40, %45 : vector<56x128xf32>
    %c0_39 = arith.constant 0 : index
    %c2_40 = arith.constant 2 : index
    %c0_41 = arith.constant 0 : index
    %c0_42 = arith.constant 0 : index
    %c0_43 = arith.constant 0 : index
    %47 = vector.load %arg1[%c0_39, %c2_40, %c0_41, %c0_42, %c0_43] : memref<1x3x9x8x128xf32, #tpu.memory_space<vmem>>, vector<1x1x9x8x128xf32>
    %48 = vector.shape_cast %47 : vector<1x1x9x8x128xf32> to vector<9x8x128xf32>
    %cst_44 = arith.constant 0.000000e+00 : f32
    %49 = vector.broadcast %cst_44 : f32 to vector<9x8x128xf32>
    %50 = arith.maximumf %48, %49 : vector<9x8x128xf32>
    %51 = arith.truncf %50 : vector<9x8x128xf32> to vector<9x8x128xbf16>
    %52 = vector.extract_strided_slice %51 {offsets = [0, 0, 0], sizes = [7, 8, 128], strides = [1, 1, 1]} : vector<9x8x128xbf16> to vector<7x8x128xbf16>
    %53 = vector.shape_cast %52 : vector<7x8x128xbf16> to vector<56x128xbf16>
    %c0_45 = arith.constant 0 : index
    %c2_46 = arith.constant 2 : index
    %c0_47 = arith.constant 0 : index
    %c0_48 = arith.constant 0 : index
    %54 = vector.load %arg2[%c0_45, %c2_46, %c0_47, %c0_48] : memref<3x3x128x128xbf16, #tpu.memory_space<vmem>>, vector<1x1x128x128xbf16>
    %55 = vector.shape_cast %54 : vector<1x1x128x128xbf16> to vector<128x128xbf16>
    %cst_49 = arith.constant dense<0.000000e+00> : vector<56x128xf32>
    %56 = tpu.matmul %53, %55, %cst_49 {dimension_numbers = #tpu.dot_dimension_numbers<[1], [0], [0], [1], [0, 0, 1, 1], [], []>} : vector<56x128xbf16>, vector<128x128xbf16>, vector<56x128xf32> -> vector<56x128xf32>
    %57 = arith.addf %46, %56 : vector<56x128xf32>
    %58 = vector.extract_strided_slice %51 {offsets = [1, 0, 0], sizes = [7, 8, 128], strides = [1, 1, 1]} : vector<9x8x128xbf16> to vector<7x8x128xbf16>
    %59 = vector.shape_cast %58 : vector<7x8x128xbf16> to vector<56x128xbf16>
    %c1_50 = arith.constant 1 : index
    %c2_51 = arith.constant 2 : index
    %c0_52 = arith.constant 0 : index
    %c0_53 = arith.constant 0 : index
    %60 = vector.load %arg2[%c1_50, %c2_51, %c0_52, %c0_53] : memref<3x3x128x128xbf16, #tpu.memory_space<vmem>>, vector<1x1x128x128xbf16>
    %61 = vector.shape_cast %60 : vector<1x1x128x128xbf16> to vector<128x128xbf16>
    %cst_54 = arith.constant dense<0.000000e+00> : vector<56x128xf32>
    %62 = tpu.matmul %59, %61, %cst_54 {dimension_numbers = #tpu.dot_dimension_numbers<[1], [0], [0], [1], [0, 0, 1, 1], [], []>} : vector<56x128xbf16>, vector<128x128xbf16>, vector<56x128xf32> -> vector<56x128xf32>
    %63 = arith.addf %57, %62 : vector<56x128xf32>
    %64 = vector.extract_strided_slice %51 {offsets = [2, 0, 0], sizes = [7, 8, 128], strides = [1, 1, 1]} : vector<9x8x128xbf16> to vector<7x8x128xbf16>
    %65 = vector.shape_cast %64 : vector<7x8x128xbf16> to vector<56x128xbf16>
    %c2_55 = arith.constant 2 : index
    %c2_56 = arith.constant 2 : index
    %c0_57 = arith.constant 0 : index
    %c0_58 = arith.constant 0 : index
    %66 = vector.load %arg2[%c2_55, %c2_56, %c0_57, %c0_58] : memref<3x3x128x128xbf16, #tpu.memory_space<vmem>>, vector<1x1x128x128xbf16>
    %67 = vector.shape_cast %66 : vector<1x1x128x128xbf16> to vector<128x128xbf16>
    %cst_59 = arith.constant dense<0.000000e+00> : vector<56x128xf32>
    %68 = tpu.matmul %65, %67, %cst_59 {dimension_numbers = #tpu.dot_dimension_numbers<[1], [0], [0], [1], [0, 0, 1, 1], [], []>} : vector<56x128xbf16>, vector<128x128xbf16>, vector<56x128xf32> -> vector<56x128xf32>
    %69 = arith.addf %63, %68 : vector<56x128xf32>
    %70 = vector.shape_cast %69 : vector<56x128xf32> to vector<7x8x128xf32>
    %c0_60 = arith.constant 0 : index
    %c0_61 = arith.constant 0 : index
    %c0_62 = arith.constant 0 : index
    %c0_63 = arith.constant 0 : index
    %71 = vector.load %arg3[%c0_60, %c0_61, %c0_62, %c0_63] : memref<1x7x8x128xf32, #tpu.memory_space<vmem>>, vector<1x7x8x128xf32>
    %72 = vector.shape_cast %71 : vector<1x7x8x128xf32> to vector<7x8x128xf32>
    %73 = vector.shape_cast %70 : vector<7x8x128xf32> to vector<1x7x8x128xf32>
    tpu.vector_store %arg3[%c0_60, %c0_61, %c0_62, %c0_63], %73 {strides = array<i32>} : memref<1x7x8x128xf32, #tpu.memory_space<vmem>>, vector<1x7x8x128xf32>,
    return
  }
  func.func @transform_0(%arg0: i32) -> (i32, i32, i32, i32, i32) {
    %c0_i32 = arith.constant 0 : i32
    %c0_i32_0 = arith.constant 0 : i32
    %c0_i32_1 = arith.constant 0 : i32
    %c0_i32_2 = arith.constant 0 : i32
    %c0_i32_3 = arith.constant 0 : i32
    return %arg0, %c0_i32, %c0_i32_0, %c0_i32_1, %c0_i32_2 : i32, i32, i32, i32, i32
  }
  func.func @transform_1(%arg0: i32) -> (i32, i32, i32, i32) {
    %c0_i32 = arith.constant 0 : i32
    %c0_i32_0 = arith.constant 0 : i32
    %c0_i32_1 = arith.constant 0 : i32
    %c0_i32_2 = arith.constant 0 : i32
    %c0_i32_3 = arith.constant 0 : i32
    return %c0_i32, %c0_i32_0, %c0_i32_1, %c0_i32_2 : i32, i32, i32, i32
  }
  func.func @transform_2(%arg0: i32) -> (i32, i32, i32, i32) {
    %c0_i32 = arith.constant 0 : i32
    %c0_i32_0 = arith.constant 0 : i32
    %c0_i32_1 = arith.constant 0 : i32
    %c0_i32_2 = arith.constant 0 : i32
    return %arg0, %c0_i32, %c0_i32_0, %c0_i32_1 : i32, i32, i32, i32
  }
}

</mosaic_0001>

<llo_original>
// kernel: _relu_conv2d_impl.1
$region0: #{_relu_conv2d_impl.1}
  #allocation0 [shape = 'u32[]', space=smem, size = 0x4, offset = 0x4, fixed_abs, tag = 'smem constant byte address 0x4 - core index']
  #allocation1 [shape = 'u32[144,128]{1,0:T(1,128)}', space=vmem, size = 0x12000, scoped, tag = 'internal scratch']
  %s0 = inlined_call_operand.vmem [shape: f32[1,3,9,8,128], index: 0, kind: input, shape index: {}]
  %s1 = inlined_call_operand.vmem [shape: bf16[3,3,128,128], index: 1, kind: input, shape index: {}]
  %s2 = inlined_call_operand.vmem [shape: f32[1,7,8,128], index: 2, kind: output, shape index: {}]
  %s3 = sld [smem:[#allocation0]]
  $region18: #{_relu_conv2d_impl.1} parent=0
    _
  %s5 = ssub.s32 1, %s3
  %s6 = scalar_select 0, %s5, %s3
  // Predicated region
  $region2: #{_relu_conv2d_impl.1} parent=0 // pred_check
    _
  $region3: #{_relu_conv2d_impl.1} parent=0 // pred_check_branch
    %8 = sbr.rel (0) target = $region5
  $region4: #{_relu_conv2d_impl.1} parent=0 // pred_region
    _
  $region5: #{_relu_conv2d_impl.1} parent=0 // pred_fallthru
    _
  // Predicated region
  $region6: #{_relu_conv2d_impl.1} parent=0 // pred_check
    _
  $region7: #{_relu_conv2d_impl.1} parent=0 // pred_check_branch
    %10 = sbr.rel (0) target = $region9
  $region8: #{_relu_conv2d_impl.1} parent=0 // pred_region
    _
  $region9: #{_relu_conv2d_impl.1} parent=0 // pred_fallthru
    _
  %v12 = vld [vmem:[%s0] sm:$0xff]
  %v13 = vld [vmem:[%s0 + $0x8] sm:$0xff]
  %v14 = vld [vmem:[%s0 + $0x10] sm:$0xff]
  %v15 = vld [vmem:[%s0 + $0x18] sm:$0xff]
  %v16 = vld [vmem:[%s0 + $0x20] sm:$0xff]
  %v17 = vld [vmem:[%s0 + $0x28] sm:$0xff]
  %v18 = vld [vmem:[%s0 + $0x30] sm:$0xff]
  %v19 = vld [vmem:[%s0 + $0x38] sm:$0xff]
  %v20 = vld [vmem:[%s0 + $0x40] sm:$0xff]
  %v21 = vmax.f32 %v12, 0.0
  %v22 = vmax.f32 %v13, 0.0
  %v23 = vmax.f32 %v14, 0.0
  %v24 = vmax.f32 %v15, 0.0
  %v25 = vmax.f32 %v16, 0.0
  %v26 = vmax.f32 %v17, 0.0
  %v27 = vmax.f32 %v18, 0.0
  %v28 = vmax.f32 %v19, 0.0
  %v29 = vmax.f32 %v20, 0.0
  %v30 = vpack.c.bf16 %v21, %v21
  %v31 = vpack.c.bf16 %v22, %v22
  %v32 = vpack.c.bf16 %v23, %v23
  %v33 = vpack.c.bf16 %v24, %v24
  %v34 = vpack.c.bf16 %v25, %v25
  %v35 = vpack.c.bf16 %v26, %v26
  %v36 = vpack.c.bf16 %v27, %v27
  %v37 = vpack.c.bf16 %v28, %v28
  %v38 = vpack.c.bf16 %v29, %v29
  %v39 = vld [vmem:[%s1] sm:$0xf]
  %v40 = vld [vmem:[%s1 + $0x4] sm:$0xf]
  %v41 = vld [vmem:[%s1 + $0x8] sm:$0xf]
  %v42 = vld [vmem:[%s1 + $0xc] sm:$0xf]
  %v43 = vld [vmem:[%s1 + $0x10] sm:$0xf]
  %v44 = vld [vmem:[%s1 + $0x14] sm:$0xf]
  %v45 = vld [vmem:[%s1 + $0x18] sm:$0xf]
  %v46 = vld [vmem:[%s1 + $0x1c] sm:$0xf]
  %v47 = vld [vmem:[%s1 + $0x20] sm:$0xf]
  %v48 = vld [vmem:[%s1 + $0x24] sm:$0xf]
  %v49 = vld [vmem:[%s1 + $0x28] sm:$0xf]
  %v50 = vld [vmem:[%s1 + $0x2c] sm:$0xf]
  %v51 = vld [vmem:[%s1 + $0x30] sm:$0xf]
  %v52 = vld [vmem:[%s1 + $0x34] sm:$0xf]
  %v53 = vld [vmem:[%s1 + $0x38] sm:$0xf]
  %v54 = vld [vmem:[%s1 + $0x3c] sm:$0xf]
  %s55 = scalar_lea.vmem %s1, 192
  %v56 = vld [vmem:[%s55] sm:$0xf]
  %v57 = vld [vmem:[%s55 + $0x4] sm:$0xf]
  %v58 = vld [vmem:[%s55 + $0x8] sm:$0xf]
  %v59 = vld [vmem:[%s55 + $0xc] sm:$0xf]
  %v60 = vld [vmem:[%s55 + $0x10] sm:$0xf]
  %v61 = vld [vmem:[%s55 + $0x14] sm:$0xf]
  %v62 = vld [vmem:[%s55 + $0x18] sm:$0xf]
  %v63 = vld [vmem:[%s55 + $0x1c] sm:$0xf]
  %v64 = vld [vmem:[%s55 + $0x20] sm:$0xf]
  %v65 = vld [vmem:[%s55 + $0x24] sm:$0xf]
  %v66 = vld [vmem:[%s55 + $0x28] sm:$0xf]
  %v67 = vld [vmem:[%s55 + $0x2c] sm:$0xf]
  %v68 = vld [vmem:[%s55 + $0x30] sm:$0xf]
  %v69 = vld [vmem:[%s55 + $0x34] sm:$0xf]
  %v70 = vld [vmem:[%s55 + $0x38] sm:$0xf]
  %v71 = vld [vmem:[%s55 + $0x3c] sm:$0xf]
  %v79 = vunpack.c.l.b16 %v31
  %v80 = vunpack.c.l.b16 %v32
  %v81 = vunpack.c.l.b16 %v33
  %v82 = vunpack.c.l.b16 %v34
  %v83 = vunpack.c.l.b16 %v35
  %v84 = vunpack.c.l.b16 %v36
  %v85 = vunpack.c.l.b16 %v37
  %v86 = vpack.c.b16 %v80, %v79
  %v87 = vpack.c.b16 %v82, %v81
  %v88 = vpack.c.b16 %v84, %v83
  %v89 = vpack.c.b16 %v85, %v85
  %v110 = vunpack.c.l.b16 %v56
  %v111 = vunpack.c.l.b16 %v57
  %v112 = vunpack.c.l.b16 %v58
  %v113 = vunpack.c.l.b16 %v59
  %v114 = vunpack.c.l.b16 %v60
  %v115 = vunpack.c.l.b16 %v61
  %v116 = vunpack.c.l.b16 %v62
  %v117 = vunpack.c.l.b16 %v63
  %v118 = vunpack.c.l.b16 %v64
  %v119 = vunpack.c.l.b16 %v65
  %v120 = vunpack.c.l.b16 %v66
  %v121 = vunpack.c.l.b16 %v67
  %v122 = vunpack.c.l.b16 %v68
  %v123 = vunpack.c.l.b16 %v69
  %v124 = vunpack.c.l.b16 %v70
  %v125 = vunpack.c.l.b16 %v71
  %v126 = vpack.c.b16 %v111, %v110
  %v127 = vpack.c.b16 %v113, %v112
  %v128 = vpack.c.b16 %v115, %v114
  %v129 = vpack.c.b16 %v117, %v116
  %v130 = vpack.c.b16 %v119, %v118
  %v131 = vpack.c.b16 %v121, %v120
  %v132 = vpack.c.b16 %v123, %v122
  %v133 = vpack.c.b16 %v125, %v124
  %142 = vmatprep.subr.bf16.mxu0 0
  %143 = vmatpush1.bf16.msra.mxu0 %v126
  %144 = vmatprep.subr.bf16.mxu0 0
  %145 = vmatpush1.bf16.msra.mxu0 %v127
  %146 = vmatprep.subr.bf16.mxu0 0
  %147 = vmatpush1.bf16.msra.mxu0 %v128
  %148 = vmatprep.subr.bf16.mxu0 0
  %149 = vmatpush1.bf16.msra.mxu0 %v129
  %150 = vmatprep.subr.bf16.mxu0 0
  %151 = vmatpush1.bf16.msra.mxu0 %v130
  %152 = vmatprep.subr.bf16.mxu0 0
  %153 = vmatpush1.bf16.msra.mxu0 %v131
  %154 = vmatprep.subr.bf16.mxu0 0
  %155 = vmatpush1.bf16.msra.mxu0 %v132
  %156 = vmatprep.subr.bf16.mxu0 0
  %157 = vmatpush1.bf16.msra.mxu0 %v133
  %158 = vmatprep.subr.bf16.mxu0 0
  %159 = vmatpush1.bf16.msra.mxu0 0
  %160 = vmatprep.subr.bf16.mxu0 0
  %161 = vmatpush1.bf16.msra.mxu0 0
  %162 = vmatprep.subr.bf16.mxu0 0
  %163 = vmatpush1.bf16.msra.mxu0 0
  %164 = vmatprep.subr.bf16.mxu0 0
  %165 = vmatpush1.bf16.msra.mxu0 0
  %166 = vmatprep.subr.bf16.mxu0 0
  %167 = vmatpush1.bf16.msra.mxu0 0
  %168 = vmatprep.subr.bf16.mxu0 0
  %169 = vmatpush1.bf16.msra.mxu0 0
  %170 = vmatprep.subr.bf16.mxu0 0
  %171 = vmatpush1.bf16.msra.mxu0 0
  %172 = vmatprep.subr.bf16.mxu0 0
  %173 = vmatpush1.bf16.msra.mxu0 0
  %174 = vmatprep.mubr.bf16.mxu0 0
  %175 = vmatmul.mubr.bf16.gmra.mrb[0].mxu0 %v86
  %v176 = vpop.f32.mrb[0].mxu0
  %v177 = vadd.f32 0.0, %v176
  %v178 = vpop.f32.mrb[0].mxu0
  %v179 = vpop.f32.mrb[0].mxu0
  %v180 = vadd.f32 0.0, %v179
  %v181 = vpop.f32.mrb[0].mxu0
  %182 = vmatprep.mubr.bf16.mxu0 0
  %183 = vmatmul.mubr.bf16.gmra.mrb[0].mxu0 %v87
  %v184 = vpop.f32.mrb[0].mxu0
  %v185 = vadd.f32 0.0, %v184
  %v186 = vpop.f32.mrb[0].mxu0
  %v187 = vpop.f32.mrb[0].mxu0
  %v188 = vadd.f32 0.0, %v187
  %v189 = vpop.f32.mrb[0].mxu0
  %190 = vmatprep.mubr.bf16.mxu0 0
  %191 = vmatmul.mubr.bf16.gmra.mrb[0].mxu0 %v88
  %v192 = vpop.f32.mrb[0].mxu0
  %v193 = vadd.f32 0.0, %v192
  %v194 = vpop.f32.mrb[0].mxu0
  %v195 = vpop.f32.mrb[0].mxu0
  %v196 = vadd.f32 0.0, %v195
  %v197 = vpop.f32.mrb[0].mxu0
  %198 = vmatprep.mubr.bf16.mxu0 0
  %199 = vmatmul.mubr.bf16.gmra.mrb[0].mxu0 %v89
  %v200 = vpop.f32.mrb[0].mxu0
  %v201 = vadd.f32 0.0, %v200
  %v202 = vpop.f32.mrb[0].mxu0
  %v203 = vpop.f32.mrb[0].mxu0
  %v204 = vpop.f32.mrb[0].mxu0
  %205 = vdwg.mxu0
  %v207 = vunpack.c.l.b16 %v30
  %v208 = vpack.c.b16 %v79, %v207
  %v209 = vpack.c.b16 %v81, %v80
  %v210 = vpack.c.b16 %v83, %v82
  %v211 = vpack.c.b16 %v84, %v84
  %v232 = vunpack.c.l.b16 %v39
  %v233 = vunpack.c.l.b16 %v40
  %v234 = vunpack.c.l.b16 %v41
  %v235 = vunpack.c.l.b16 %v42
  %v236 = vunpack.c.l.b16 %v43
  %v237 = vunpack.c.l.b16 %v44
  %v238 = vunpack.c.l.b16 %v45
  %v239 = vunpack.c.l.b16 %v46
  %v240 = vunpack.c.l.b16 %v47
  %v241 = vunpack.c.l.b16 %v48
  %v242 = vunpack.c.l.b16 %v49
  %v243 = vunpack.c.l.b16 %v50
  %v244 = vunpack.c.l.b16 %v51
  %v245 = vunpack.c.l.b16 %v52
  %v246 = vunpack.c.l.b16 %v53
  %v247 = vunpack.c.l.b16 %v54
  %v248 = vpack.c.b16 %v233, %v232
  %v249 = vpack.c.b16 %v235, %v234
  %v250 = vpack.c.b16 %v237, %v236
  %v251 = vpack.c.b16 %v239, %v238
  %v252 = vpack.c.b16 %v241, %v240
  %v253 = vpack.c.b16 %v243, %v242
  %v254 = vpack.c.b16 %v245, %v244
  %v255 = vpack.c.b16 %v247, %v246
  %264 = vmatprep.subr.bf16.mxu0 0
  %265 = vmatpush1.bf16.msra.mxu0 %v248
  %266 = vmatprep.subr.bf16.mxu0 0
  %267 = vmatpush1.bf16.msra.mxu0 %v249
  %268 = vmatprep.subr.bf16.mxu0 0
  %269 = vmatpush1.bf16.msra.mxu0 %v250
  %270 = vmatprep.subr.bf16.mxu0 0
  %271 = vmatpush1.bf16.msra.mxu0 %v251
  %272 = vmatprep.subr.bf16.mxu0 0
  %273 = vmatpush1.bf16.msra.mxu0 %v252
  %274 = vmatprep.subr.bf16.mxu0 0
  %275 = vmatpush1.bf16.msra.mxu0 %v253
  %276 = vmatprep.subr.bf16.mxu0 0
  %277 = vmatpush1.bf16.msra.mxu0 %v254
  %278 = vmatprep.subr.bf16.mxu0 0
  %279 = vmatpush1.bf16.msra.mxu0 %v255
  %280 = vmatprep.subr.bf16.mxu0 0
  %281 = vmatpush1.bf16.msra.mxu0 0
  %282 = vmatprep.subr.bf16.mxu0 0
  %283 = vmatpush1.bf16.msra.mxu0 0
  %284 = vmatprep.subr.bf16.mxu0 0
  %285 = vmatpush1.bf16.msra.mxu0 0
  %286 = vmatprep.subr.bf16.mxu0 0
  %287 = vmatpush1.bf16.msra.mxu0 0
  %288 = vmatprep.subr.bf16.mxu0 0
  %289 = vmatpush1.bf16.msra.mxu0 0
  %290 = vmatprep.subr.bf16.mxu0 0
  %291 = vmatpush1.bf16.msra.mxu0 0
  %292 = vmatprep.subr.bf16.mxu0 0
  %293 = vmatpush1.bf16.msra.mxu0 0
  %294 = vmatprep.subr.bf16.mxu0 0
  %295 = vmatpush1.bf16.msra.mxu0 0
  %296 = vmatprep.mubr.bf16.mxu0 0
  %297 = vmatmul.mubr.bf16.gmra.mrb[0].mxu0 %v208
  %v298 = vpop.f32.mrb[0].mxu0
  %v299 = vadd.f32 %v177, %v298
  %v300 = vpop.f32.mrb[0].mxu0
  %v301 = vpop.f32.mrb[0].mxu0
  %v302 = vadd.f32 %v180, %v301
  %v303 = vpop.f32.mrb[0].mxu0
  %304 = vmatprep.mubr.bf16.mxu0 0
  %305 = vmatmul.mubr.bf16.gmra.mrb[0].mxu0 %v209
  %v306 = vpop.f32.mrb[0].mxu0
  %v307 = vadd.f32 %v185, %v306
  %v308 = vpop.f32.mrb[0].mxu0
  %v309 = vpop.f32.mrb[0].mxu0
  %v310 = vadd.f32 %v188, %v309
  %v311 = vpop.f32.mrb[0].mxu0
  %312 = vmatprep.mubr.bf16.mxu0 0
  %313 = vmatmul.mubr.bf16.gmra.mrb[0].mxu0 %v210
  %v314 = vpop.f32.mrb[0].mxu0
  %v315 = vadd.f32 %v193, %v314
  %v316 = vpop.f32.mrb[0].mxu0
  %v317 = vpop.f32.mrb[0].mxu0
  %v318 = vadd.f32 %v196, %v317
  %v319 = vpop.f32.mrb[0].mxu0
  %320 = vmatprep.mubr.bf16.mxu0 0
  %321 = vmatmul.mubr.bf16.gmra.mrb[0].mxu0 %v211
  %v322 = vpop.f32.mrb[0].mxu0
  %v323 = vadd.f32 %v201, %v322
  %v324 = vpop.f32.mrb[0].mxu0
  %v325 = vpop.f32.mrb[0].mxu0
  %v326 = vpop.f32.mrb[0].mxu0
  %327 = vdwg.mxu0
  %s328 = scalar_lea.vmem %s1, 384
  %v329 = vld [vmem:[%s328] sm:$0xf]
  %v330 = vld [vmem:[%s328 + $0x4] sm:$0xf]
  %v331 = vld [vmem:[%s328 + $0x8] sm:$0xf]
  %v332 = vld [vmem:[%s328 + $0xc] sm:$0xf]
  %v333 = vld [vmem:[%s328 + $0x10] sm:$0xf]
  %v334 = vld [vmem:[%s328 + $0x14] sm:$0xf]
  %v335 = vld [vmem:[%s328 + $0x18] sm:$0xf]
  %v336 = vld [vmem:[%s328 + $0x1c] sm:$0xf]
  %v337 = vld [vmem:[%s328 + $0x20] sm:$0xf]
  %v338 = vld [vmem:[%s328 + $0x24] sm:$0xf]
  %v339 = vld [vmem:[%s328 + $0x28] sm:$0xf]
  %v340 = vld [vmem:[%s328 + $0x2c] sm:$0xf]
  %v341 = vld [vmem:[%s328 + $0x30] sm:$0xf]
  %v342 = vld [vmem:[%s328 + $0x34] sm:$0xf]
  %v343 = vld [vmem:[%s328 + $0x38] sm:$0xf]
  %v344 = vld [vmem:[%s328 + $0x3c] sm:$0xf]
  %v346 = vunpack.c.l.b16 %v38
  %v347 = vpack.c.b16 %v85, %v84
  %v348 = vpack.c.b16 %v346, %v346
  %v367 = vunpack.c.l.b16 %v329
  %v368 = vunpack.c.l.b16 %v330
  %v369 = vunpack.c.l.b16 %v331
  %v370 = vunpack.c.l.b16 %v332
  %v371 = vunpack.c.l.b16 %v333
  %v372 = vunpack.c.l.b16 %v334
  %v373 = vunpack.c.l.b16 %v335
  %v374 = vunpack.c.l.b16 %v336
  %v375 = vunpack.c.l.b16 %v337
  %v376 = vunpack.c.l.b16 %v338
  %v377 = vunpack.c.l.b16 %v339
  %v378 = vunpack.c.l.b16 %v340
  %v379 = vunpack.c.l.b16 %v341
  %v380 = vunpack.c.l.b16 %v342
  %v381 = vunpack.c.l.b16 %v343
  %v382 = vunpack.c.l.b16 %v344
  %v383 = vpack.c.b16 %v368, %v367
  %v384 = vpack.c.b16 %v370, %v369
  %v385 = vpack.c.b16 %v372, %v371
  %v386 = vpack.c.b16 %v374, %v373
  %v387 = vpack.c.b16 %v376, %v375
  %v388 = vpack.c.b16 %v378, %v377
  %v389 = vpack.c.b16 %v380, %v379
  %v390 = vpack.c.b16 %v382, %v381
  %399 = vmatprep.subr.bf16.mxu0 0
  %400 = vmatpush1.bf16.msra.mxu0 %v383
  %401 = vmatprep.subr.bf16.mxu0 0
  %402 = vmatpush1.bf16.msra.mxu0 %v384
  %403 = vmatprep.subr.bf16.mxu0 0
  %404 = vmatpush1.bf16.msra.mxu0 %v385
  %405 = vmatprep.subr.bf16.mxu0 0
  %406 = vmatpush1.bf16.msra.mxu0 %v386
  %407 = vmatprep.subr.bf16.mxu0 0
  %408 = vmatpush1.bf16.msra.mxu0 %v387
  %409 = vmatprep.subr.bf16.mxu0 0
  %410 = vmatpush1.bf16.msra.mxu0 %v388
  %411 = vmatprep.subr.bf16.mxu0 0
  %412 = vmatpush1.bf16.msra.mxu0 %v389
  %413 = vmatprep.subr.bf16.mxu0 0
  %414 = vmatpush1.bf16.msra.mxu0 %v390
  %415 = vmatprep.subr.bf16.mxu0 0
  %416 = vmatpush1.bf16.msra.mxu0 0
  %417 = vmatprep.subr.bf16.mxu0 0
  %418 = vmatpush1.bf16.msra.mxu0 0
  %419 = vmatprep.subr.bf16.mxu0 0
  %420 = vmatpush1.bf16.msra.mxu0 0
  %421 = vmatprep.subr.bf16.mxu0 0
  %422 = vmatpush1.bf16.msra.mxu0 0
  %423 = vmatprep.subr.bf16.mxu0 0
  %424 = vmatpush1.bf16.msra.mxu0 0
  %425 = vmatprep.subr.bf16.mxu0 0
  %426 = vmatpush1.bf16.msra.mxu0 0
  %427 = vmatprep.subr.bf16.mxu0 0
  %428 = vmatpush1.bf16.msra.mxu0 0
  %429 = vmatprep.subr.bf16.mxu0 0
  %430 = vmatpush1.bf16.msra.mxu0 0
  %431 = vmatprep.mubr.bf16.mxu0 0
  %432 = vmatmul.mubr.bf16.gmra.mrb[0].mxu0 %v209
  %v433 = vpop.f32.mrb[0].mxu0
  %v434 = vadd.f32 0.0, %v433
  %v435 = vpop.f32.mrb[0].mxu0
  %v436 = vpop.f32.mrb[0].mxu0
  %v437 = vadd.f32 0.0, %v436
  %v438 = vpop.f32.mrb[0].mxu0
  %439 = vmatprep.mubr.bf16.mxu0 0
  %440 = vmatmul.mubr.bf16.gmra.mrb[0].mxu0 %v210
  %v441 = vpop.f32.mrb[0].mxu0
  %v442 = vadd.f32 0.0, %v441
  %v443 = vpop.f32.mrb[0].mxu0
  %v444 = vpop.f32.mrb[0].mxu0
  %v445 = vadd.f32 0.0, %v444
  %v446 = vpop.f32.mrb[0].mxu0
  %447 = vmatprep.mubr.bf16.mxu0 0
  %448 = vmatmul.mubr.bf16.gmra.mrb[0].mxu0 %v347
  %v449 = vpop.f32.mrb[0].mxu0
  %v450 = vadd.f32 0.0, %v449
  %v451 = vpop.f32.mrb[0].mxu0
  %v452 = vpop.f32.mrb[0].mxu0
  %v453 = vadd.f32 0.0, %v452
  %v454 = vpop.f32.mrb[0].mxu0
  %455 = vmatprep.mubr.bf16.mxu0 0
  %456 = vmatmul.mubr.bf16.gmra.mrb[0].mxu0 %v348
  %v457 = vpop.f32.mrb[0].mxu0
  %v458 = vadd.f32 0.0, %v457
  %v459 = vpop.f32.mrb[0].mxu0
  %v460 = vpop.f32.mrb[0].mxu0
  %v461 = vpop.f32.mrb[0].mxu0
  %462 = vdwg.mxu0
  %v463 = vadd.f32 %v299, %v434
  %v464 = vadd.f32 %v302, %v437
  %v465 = vadd.f32 %v307, %v442
  %v466 = vadd.f32 %v310, %v445
  %v467 = vadd.f32 %v315, %v450
  %v468 = vadd.f32 %v318, %v453
  %v469 = vadd.f32 %v323, %v458
  %s470 = scalar_lea.vmem %s0, 72
  %v471 = vld [vmem:[%s470] sm:$0xff]
  %v472 = vld [vmem:[%s470 + $0x8] sm:$0xff]
  %v473 = vld [vmem:[%s470 + $0x10] sm:$0xff]
  %v474 = vld [vmem:[%s470 + $0x18] sm:$0xff]
  %v475 = vld [vmem:[%s470 + $0x20] sm:$0xff]
  %v476 = vld [vmem:[%s470 + $0x28] sm:$0xff]
  %v477 = vld [vmem:[%s470 + $0x30] sm:$0xff]
  %v478 = vld [vmem:[%s470 + $0x38] sm:$0xff]
  %v479 = vld [vmem:[%s470 + $0x40] sm:$0xff]
  %v480 = vmax.f32 %v471, 0.0
  %v481 = vmax.f32 %v472, 0.0
  %v482 = vmax.f32 %v473, 0.0
  %v483 = vmax.f32 %v474, 0.0
  %v484 = vmax.f32 %v475, 0.0
  %v485 = vmax.f32 %v476, 0.0
  %v486 = vmax.f32 %v477, 0.0
  %v487 = vmax.f32 %v478, 0.0
  %v488 = vmax.f32 %v479, 0.0
  %v489 = vpack.c.bf16 %v480, %v480
  %v490 = vpack.c.bf16 %v481, %v481
  %v491 = vpack.c.bf16 %v482, %v482
  %v492 = vpack.c.bf16 %v483, %v483
  %v493 = vpack.c.bf16 %v484, %v484
  %v494 = vpack.c.bf16 %v485, %v485
  %v495 = vpack.c.bf16 %v486, %v486
  %v496 = vpack.c.bf16 %v487, %v487
  %v497 = vpack.c.bf16 %v488, %v488
  %s498 = scalar_lea.vmem %s1, 64
  %v499 = vld [vmem:[%s498] sm:$0xf]
  %v500 = vld [vmem:[%s498 + $0x4] sm:$0xf]
  %v501 = vld [vmem:[%s498 + $0x8] sm:$0xf]
  %v502 = vld [vmem:[%s498 + $0xc] sm:$0xf]
  %v503 = vld [vmem:[%s498 + $0x10] sm:$0xf]
  %v504 = vld [vmem:[%s498 + $0x14] sm:$0xf]
  %v505 = vld [vmem:[%s498 + $0x18] sm:$0xf]
  %v506 = vld [vmem:[%s498 + $0x1c] sm:$0xf]
  %v507 = vld [vmem:[%s498 + $0x20] sm:$0xf]
  %v508 = vld [vmem:[%s498 + $0x24] sm:$0xf]
  %v509 = vld [vmem:[%s498 + $0x28] sm:$0xf]
  %v510 = vld [vmem:[%s498 + $0x2c] sm:$0xf]
  %v511 = vld [vmem:[%s498 + $0x30] sm:$0xf]
  %v512 = vld [vmem:[%s498 + $0x34] sm:$0xf]
  %v513 = vld [vmem:[%s498 + $0x38] sm:$0xf]
  %v514 = vld [vmem:[%s498 + $0x3c] sm:$0xf]
  %v522 = vunpack.c.l.b16 %v489
  %v523 = vunpack.c.l.b16 %v490
  %v524 = vunpack.c.l.b16 %v491
  %v525 = vunpack.c.l.b16 %v492
  %v526 = vunpack.c.l.b16 %v493
  %v527 = vunpack.c.l.b16 %v494
  %v528 = vunpack.c.l.b16 %v495
  %v529 = vpack.c.b16 %v523, %v522
  %v530 = vpack.c.b16 %v525, %v524
  %v531 = vpack.c.b16 %v527, %v526
  %v532 = vpack.c.b16 %v528, %v528
  %v553 = vunpack.c.l.b16 %v499
  %v554 = vunpack.c.l.b16 %v500
  %v555 = vunpack.c.l.b16 %v501
  %v556 = vunpack.c.l.b16 %v502
  %v557 = vunpack.c.l.b16 %v503
  %v558 = vunpack.c.l.b16 %v504
  %v559 = vunpack.c.l.b16 %v505
  %v560 = vunpack.c.l.b16 %v506
  %v561 = vunpack.c.l.b16 %v507
  %v562 = vunpack.c.l.b16 %v508
  %v563 = vunpack.c.l.b16 %v509
  %v564 = vunpack.c.l.b16 %v510
  %v565 = vunpack.c.l.b16 %v511
  %v566 = vunpack.c.l.b16 %v512
  %v567 = vunpack.c.l.b16 %v513
  %v568 = vunpack.c.l.b16 %v514
  %v569 = vpack.c.b16 %v554, %v553
  %v570 = vpack.c.b16 %v556, %v555
  %v571 = vpack.c.b16 %v558, %v557
  %v572 = vpack.c.b16 %v560, %v559
  %v573 = vpack.c.b16 %v562, %v561
  %v574 = vpack.c.b16 %v564, %v563
  %v575 = vpack.c.b16 %v566, %v565
  %v576 = vpack.c.b16 %v568, %v567
  %585 = vmatprep.subr.bf16.mxu0 0
  %586 = vmatpush1.bf16.msra.mxu0 %v569
  %587 = vmatprep.subr.bf16.mxu0 0
  %588 = vmatpush1.bf16.msra.mxu0 %v570
  %589 = vmatprep.subr.bf16.mxu0 0
  %590 = vmatpush1.bf16.msra.mxu0 %v571
  %591 = vmatprep.subr.bf16.mxu0 0
  %592 = vmatpush1.bf16.msra.mxu0 %v572
  %593 = vmatprep.subr.bf16.mxu0 0
  %594 = vmatpush1.bf16.msra.mxu0 %v573
  %595 = vmatprep.subr.bf16.mxu0 0
  %596 = vmatpush1.bf16.msra.mxu0 %v574
  %597 = vmatprep.subr.bf16.mxu0 0
  %598 = vmatpush1.bf16.msra.mxu0 %v575
  %599 = vmatprep.subr.bf16.mxu0 0
  %600 = vmatpush1.bf16.msra.mxu0 %v576
  %601 = vmatprep.subr.bf16.mxu0 0
  %602 = vmatpush1.bf16.msra.mxu0 0
  %603 = vmatprep.subr.bf16.mxu0 0
  %604 = vmatpush1.bf16.msra.mxu0 0
  %605 = vmatprep.subr.bf16.mxu0 0
  %606 = vmatpush1.bf16.msra.mxu0 0
  %607 = vmatprep.subr.bf16.mxu0 0
  %608 = vmatpush1.bf16.msra.mxu0 0
  %609 = vmatprep.subr.bf16.mxu0 0
  %610 = vmatpush1.bf16.msra.mxu0 0
  %611 = vmatprep.subr.bf16.mxu0 0
  %612 = vmatpush1.bf16.msra.mxu0 0
  %613 = vmatprep.subr.bf16.mxu0 0
  %614 = vmatpush1.bf16.msra.mxu0 0
  %615 = vmatprep.subr.bf16.mxu0 0
  %616 = vmatpush1.bf16.msra.mxu0 0
  %617 = vmatprep.mubr.bf16.mxu0 0
  %618 = vmatmul.mubr.bf16.gmra.mrb[0].mxu0 %v529
  %v619 = vpop.f32.mrb[0].mxu0
  %v620 = vadd.f32 0.0, %v619
  %v621 = vpop.f32.mrb[0].mxu0
  %v622 = vpop.f32.mrb[0].mxu0
  %v623 = vadd.f32 0.0, %v622
  %v624 = vpop.f32.mrb[0].mxu0
  %625 = vmatprep.mubr.bf16.mxu0 0
  %626 = vmatmul.mubr.bf16.gmra.mrb[0].mxu0 %v530
  %v627 = vpop.f32.mrb[0].mxu0
  %v628 = vadd.f32 0.0, %v627
  %v629 = vpop.f32.mrb[0].mxu0
  %v630 = vpop.f32.mrb[0].mxu0
  %v631 = vadd.f32 0.0, %v630
  %v632 = vpop.f32.mrb[0].mxu0
  %633 = vmatprep.mubr.bf16.mxu0 0
  %634 = vmatmul.mubr.bf16.gmra.mrb[0].mxu0 %v531
  %v635 = vpop.f32.mrb[0].mxu0
  %v636 = vadd.f32 0.0, %v635
  %v637 = vpop.f32.mrb[0].mxu0
  %v638 = vpop.f32.mrb[0].mxu0
  %v639 = vadd.f32 0.0, %v638
  %v640 = vpop.f32.mrb[0].mxu0
  %641 = vmatprep.mubr.bf16.mxu0 0
  %642 = vmatmul.mubr.bf16.gmra.mrb[0].mxu0 %v532
  %v643 = vpop.f32.mrb[0].mxu0
  %v644 = vadd.f32 0.0, %v643
  %v645 = vpop.f32.mrb[0].mxu0
  %v646 = vpop.f32.mrb[0].mxu0
  %v647 = vpop.f32.mrb[0].mxu0
  %648 = vdwg.mxu0
  %v649 = vadd.f32 %v463, %v620
  %v650 = vadd.f32 %v464, %v623
  %v651 = vadd.f32 %v465, %v628
  %v652 = vadd.f32 %v466, %v631
  %v653 = vadd.f32 %v467, %v636
  %v654 = vadd.f32 %v468, %v639
  %v655 = vadd.f32 %v469, %v644
  %s656 = scalar_lea.vmem %s1, 256
  %v657 = vld [vmem:[%s656] sm:$0xf]
  %v658 = vld [vmem:[%s656 + $0x4] sm:$0xf]
  %v659 = vld [vmem:[%s656 + $0x8] sm:$0xf]
  %v660 = vld [vmem:[%s656 + $0xc] sm:$0xf]
  %v661 = vld [vmem:[%s656 + $0x10] sm:$0xf]
  %v662 = vld [vmem:[%s656 + $0x14] sm:$0xf]
  %v663 = vld [vmem:[%s656 + $0x18] sm:$0xf]
  %v664 = vld [vmem:[%s656 + $0x1c] sm:$0xf]
  %v665 = vld [vmem:[%s656 + $0x20] sm:$0xf]
  %v666 = vld [vmem:[%s656 + $0x24] sm:$0xf]
  %v667 = vld [vmem:[%s656 + $0x28] sm:$0xf]
  %v668 = vld [vmem:[%s656 + $0x2c] sm:$0xf]
  %v669 = vld [vmem:[%s656 + $0x30] sm:$0xf]
  %v670 = vld [vmem:[%s656 + $0x34] sm:$0xf]
  %v671 = vld [vmem:[%s656 + $0x38] sm:$0xf]
  %v672 = vld [vmem:[%s656 + $0x3c] sm:$0xf]
  %v674 = vunpack.c.l.b16 %v496
  %v675 = vpack.c.b16 %v524, %v523
  %v676 = vpack.c.b16 %v526, %v525
  %v677 = vpack.c.b16 %v528, %v527
  %v678 = vpack.c.b16 %v674, %v674
  %v699 = vunpack.c.l.b16 %v657
  %v700 = vunpack.c.l.b16 %v658
  %v701 = vunpack.c.l.b16 %v659
  %v702 = vunpack.c.l.b16 %v660
  %v703 = vunpack.c.l.b16 %v661
  %v704 = vunpack.c.l.b16 %v662
  %v705 = vunpack.c.l.b16 %v663
  %v706 = vunpack.c.l.b16 %v664
  %v707 = vunpack.c.l.b16 %v665
  %v708 = vunpack.c.l.b16 %v666
  %v709 = vunpack.c.l.b16 %v667
  %v710 = vunpack.c.l.b16 %v668
  %v711 = vunpack.c.l.b16 %v669
  %v712 = vunpack.c.l.b16 %v670
  %v713 = vunpack.c.l.b16 %v671
  %v714 = vunpack.c.l.b16 %v672
  %v715 = vpack.c.b16 %v700, %v699
  %v716 = vpack.c.b16 %v702, %v701
  %v717 = vpack.c.b16 %v704, %v703
  %v718 = vpack.c.b16 %v706, %v705
  %v719 = vpack.c.b16 %v708, %v707
  %v720 = vpack.c.b16 %v710, %v709
  %v721 = vpack.c.b16 %v712, %v711
  %v722 = vpack.c.b16 %v714, %v713
  %731 = vmatprep.subr.bf16.mxu0 0
  %732 = vmatpush1.bf16.msra.mxu0 %v715
  %733 = vmatprep.subr.bf16.mxu0 0
  %734 = vmatpush1.bf16.msra.mxu0 %v716
  %735 = vmatprep.subr.bf16.mxu0 0
  %736 = vmatpush1.bf16.msra.mxu0 %v717
  %737 = vmatprep.subr.bf16.mxu0 0
  %738 = vmatpush1.bf16.msra.mxu0 %v718
  %739 = vmatprep.subr.bf16.mxu0 0
  %740 = vmatpush1.bf16.msra.mxu0 %v719
  %741 = vmatprep.subr.bf16.mxu0 0
  %742 = vmatpush1.bf16.msra.mxu0 %v720
  %743 = vmatprep.subr.bf16.mxu0 0
  %744 = vmatpush1.bf16.msra.mxu0 %v721
  %745 = vmatprep.subr.bf16.mxu0 0
  %746 = vmatpush1.bf16.msra.mxu0 %v722
  %747 = vmatprep.subr.bf16.mxu0 0
  %748 = vmatpush1.bf16.msra.mxu0 0
  %749 = vmatprep.subr.bf16.mxu0 0
  %750 = vmatpush1.bf16.msra.mxu0 0
  %751 = vmatprep.subr.bf16.mxu0 0
  %752 = vmatpush1.bf16.msra.mxu0 0
  %753 = vmatprep.subr.bf16.mxu0 0
  %754 = vmatpush1.bf16.msra.mxu0 0
  %755 = vmatprep.subr.bf16.mxu0 0
  %756 = vmatpush1.bf16.msra.mxu0 0
  %757 = vmatprep.subr.bf16.mxu0 0
  %758 = vmatpush1.bf16.msra.mxu0 0
  %759 = vmatprep.subr.bf16.mxu0 0
  %760 = vmatpush1.bf16.msra.mxu0 0
  %761 = vmatprep.subr.bf16.mxu0 0
  %762 = vmatpush1.bf16.msra.mxu0 0
  %763 = vmatprep.mubr.bf16.mxu0 0
  %764 = vmatmul.mubr.bf16.gmra.mrb[0].mxu0 %v675
  %v765 = vpop.f32.mrb[0].mxu0
  %v766 = vadd.f32 0.0, %v765
  %v767 = vpop.f32.mrb[0].mxu0
  %v768 = vpop.f32.mrb[0].mxu0
  %v769 = vadd.f32 0.0, %v768
  %v770 = vpop.f32.mrb[0].mxu0
  %771 = vmatprep.mubr.bf16.mxu0 0
  %772 = vmatmul.mubr.bf16.gmra.mrb[0].mxu0 %v676
  %v773 = vpop.f32.mrb[0].mxu0
  %v774 = vadd.f32 0.0, %v773
  %v775 = vpop.f32.mrb[0].mxu0
  %v776 = vpop.f32.mrb[0].mxu0
  %v777 = vadd.f32 0.0, %v776
  %v778 = vpop.f32.mrb[0].mxu0
  %779 = vmatprep.mubr.bf16.mxu0 0
  %780 = vmatmul.mubr.bf16.gmra.mrb[0].mxu0 %v677
  %v781 = vpop.f32.mrb[0].mxu0
  %v782 = vadd.f32 0.0, %v781
  %v783 = vpop.f32.mrb[0].mxu0
  %v784 = vpop.f32.mrb[0].mxu0
  %v785 = vadd.f32 0.0, %v784
  %v786 = vpop.f32.mrb[0].mxu0
  %787 = vmatprep.mubr.bf16.mxu0 0
  %788 = vmatmul.mubr.bf16.gmra.mrb[0].mxu0 %v678
  %v789 = vpop.f32.mrb[0].mxu0
  %v790 = vadd.f32 0.0, %v789
  %v791 = vpop.f32.mrb[0].mxu0
  %v792 = vpop.f32.mrb[0].mxu0
  %v793 = vpop.f32.mrb[0].mxu0
  %794 = vdwg.mxu0
  %v795 = vadd.f32 %v649, %v766
  %v796 = vadd.f32 %v650, %v769
  %v797 = vadd.f32 %v651, %v774
  %v798 = vadd.f32 %v652, %v777
  %v799 = vadd.f32 %v653, %v782
  %v800 = vadd.f32 %v654, %v785
  %v801 = vadd.f32 %v655, %v790
  %s802 = scalar_lea.vmem %s1, 448
  %v803 = vld [vmem:[%s802] sm:$0xf]
  %v804 = vld [vmem:[%s802 + $0x4] sm:$0xf]
  %v805 = vld [vmem:[%s802 + $0x8] sm:$0xf]
  %v806 = vld [vmem:[%s802 + $0xc] sm:$0xf]
  %v807 = vld [vmem:[%s802 + $0x10] sm:$0xf]
  %v808 = vld [vmem:[%s802 + $0x14] sm:$0xf]
  %v809 = vld [vmem:[%s802 + $0x18] sm:$0xf]
  %v810 = vld [vmem:[%s802 + $0x1c] sm:$0xf]
  %v811 = vld [vmem:[%s802 + $0x20] sm:$0xf]
  %v812 = vld [vmem:[%s802 + $0x24] sm:$0xf]
  %v813 = vld [vmem:[%s802 + $0x28] sm:$0xf]
  %v814 = vld [vmem:[%s802 + $0x2c] sm:$0xf]
  %v815 = vld [vmem:[%s802 + $0x30] sm:$0xf]
  %v816 = vld [vmem:[%s802 + $0x34] sm:$0xf]
  %v817 = vld [vmem:[%s802 + $0x38] sm:$0xf]
  %v818 = vld [vmem:[%s802 + $0x3c] sm:$0xf]
  %v820 = vunpack.c.l.b16 %v497
  %v821 = vpack.c.b16 %v674, %v528
  %v822 = vpack.c.b16 %v820, %v820
  %v841 = vunpack.c.l.b16 %v803
  %v842 = vunpack.c.l.b16 %v804
  %v843 = vunpack.c.l.b16 %v805
  %v844 = vunpack.c.l.b16 %v806
  %v845 = vunpack.c.l.b16 %v807
  %v846 = vunpack.c.l.b16 %v808
  %v847 = vunpack.c.l.b16 %v809
  %v848 = vunpack.c.l.b16 %v810
  %v849 = vunpack.c.l.b16 %v811
  %v850 = vunpack.c.l.b16 %v812
  %v851 = vunpack.c.l.b16 %v813
  %v852 = vunpack.c.l.b16 %v814
  %v853 = vunpack.c.l.b16 %v815
  %v854 = vunpack.c.l.b16 %v816
  %v855 = vunpack.c.l.b16 %v817
  %v856 = vunpack.c.l.b16 %v818
  %v857 = vpack.c.b16 %v842, %v841
  %v858 = vpack.c.b16 %v844, %v843
  %v859 = vpack.c.b16 %v846, %v845
  %v860 = vpack.c.b16 %v848, %v847
  %v861 = vpack.c.b16 %v850, %v849
  %v862 = vpack.c.b16 %v852, %v851
  %v863 = vpack.c.b16 %v854, %v853
  %v864 = vpack.c.b16 %v856, %v855
  %873 = vmatprep.subr.bf16.mxu0 0
  %874 = vmatpush1.bf16.msra.mxu0 %v857
  %875 = vmatprep.subr.bf16.mxu0 0
  %876 = vmatpush1.bf16.msra.mxu0 %v858
  %877 = vmatprep.subr.bf16.mxu0 0
  %878 = vmatpush1.bf16.msra.mxu0 %v859
  %879 = vmatprep.subr.bf16.mxu0 0
  %880 = vmatpush1.bf16.msra.mxu0 %v860
  %881 = vmatprep.subr.bf16.mxu0 0
  %882 = vmatpush1.bf16.msra.mxu0 %v861
  %883 = vmatprep.subr.bf16.mxu0 0
  %884 = vmatpush1.bf16.msra.mxu0 %v862
  %885 = vmatprep.subr.bf16.mxu0 0
  %886 = vmatpush1.bf16.msra.mxu0 %v863
  %887 = vmatprep.subr.bf16.mxu0 0
  %888 = vmatpush1.bf16.msra.mxu0 %v864
  %889 = vmatprep.subr.bf16.mxu0 0
  %890 = vmatpush1.bf16.msra.mxu0 0
  %891 = vmatprep.subr.bf16.mxu0 0
  %892 = vmatpush1.bf16.msra.mxu0 0
  %893 = vmatprep.subr.bf16.mxu0 0
  %894 = vmatpush1.bf16.msra.mxu0 0
  %895 = vmatprep.subr.bf16.mxu0 0
  %896 = vmatpush1.bf16.msra.mxu0 0
  %897 = vmatprep.subr.bf16.mxu0 0
  %898 = vmatpush1.bf16.msra.mxu0 0
  %899 = vmatprep.subr.bf16.mxu0 0
  %900 = vmatpush1.bf16.msra.mxu0 0
  %901 = vmatprep.subr.bf16.mxu0 0
  %902 = vmatpush1.bf16.msra.mxu0 0
  %903 = vmatprep.subr.bf16.mxu0 0
  %904 = vmatpush1.bf16.msra.mxu0 0
  %905 = vmatprep.mubr.bf16.mxu0 0
  %906 = vmatmul.mubr.bf16.gmra.mrb[0].mxu0 %v530
  %v907 = vpop.f32.mrb[0].mxu0
  %v908 = vadd.f32 0.0, %v907
  %v909 = vpop.f32.mrb[0].mxu0
  %v910 = vpop.f32.mrb[0].mxu0
  %v911 = vadd.f32 0.0, %v910
  %v912 = vpop.f32.mrb[0].mxu0
  %913 = vmatprep.mubr.bf16.mxu0 0
  %914 = vmatmul.mubr.bf16.gmra.mrb[0].mxu0 %v531
  %v915 = vpop.f32.mrb[0].mxu0
  %v916 = vadd.f32 0.0, %v915
  %v917 = vpop.f32.mrb[0].mxu0
  %v918 = vpop.f32.mrb[0].mxu0
  %v919 = vadd.f32 0.0, %v918
  %v920 = vpop.f32.mrb[0].mxu0
  %921 = vmatprep.mubr.bf16.mxu0 0
  %922 = vmatmul.mubr.bf16.gmra.mrb[0].mxu0 %v821
  %v923 = vpop.f32.mrb[0].mxu0
  %v924 = vadd.f32 0.0, %v923
  %v925 = vpop.f32.mrb[0].mxu0
  %v926 = vpop.f32.mrb[0].mxu0
  %v927 = vadd.f32 0.0, %v926
  %v928 = vpop.f32.mrb[0].mxu0
  %929 = vmatprep.mubr.bf16.mxu0 0
  %930 = vmatmul.mubr.bf16.gmra.mrb[0].mxu0 %v822
  %v931 = vpop.f32.mrb[0].mxu0
  %v932 = vadd.f32 0.0, %v931
  %v933 = vpop.f32.mrb[0].mxu0
  %v934 = vpop.f32.mrb[0].mxu0
  %v935 = vpop.f32.mrb[0].mxu0
  %936 = vdwg.mxu0
  %v937 = vadd.f32 %v795, %v908
  %v938 = vadd.f32 %v796, %v911
  %v939 = vadd.f32 %v797, %v916
  %v940 = vadd.f32 %v798, %v919
  %v941 = vadd.f32 %v799, %v924
  %v942 = vadd.f32 %v800, %v927
  %v943 = vadd.f32 %v801, %v932
  %s944 = scalar_lea.vmem %s0, 144
  %v945 = vld [vmem:[%s944] sm:$0xff]
  %v946 = vld [vmem:[%s944 + $0x8] sm:$0xff]
  %v947 = vld [vmem:[%s944 + $0x10] sm:$0xff]
  %v948 = vld [vmem:[%s944 + $0x18] sm:$0xff]
  %v949 = vld [vmem:[%s944 + $0x20] sm:$0xff]
  %v950 = vld [vmem:[%s944 + $0x28] sm:$0xff]
  %v951 = vld [vmem:[%s944 + $0x30] sm:$0xff]
  %v952 = vld [vmem:[%s944 + $0x38] sm:$0xff]
  %v953 = vld [vmem:[%s944 + $0x40] sm:$0xff]
  %v954 = vmax.f32 %v945, 0.0
  %v955 = vmax.f32 %v946, 0.0
  %v956 = vmax.f32 %v947, 0.0
  %v957 = vmax.f32 %v948, 0.0
  %v958 = vmax.f32 %v949, 0.0
  %v959 = vmax.f32 %v950, 0.0
  %v960 = vmax.f32 %v951, 0.0
  %v961 = vmax.f32 %v952, 0.0
  %v962 = vmax.f32 %v953, 0.0
  %v963 = vpack.c.bf16 %v954, %v954
  %v964 = vpack.c.bf16 %v955, %v955
  %v965 = vpack.c.bf16 %v956, %v956
  %v966 = vpack.c.bf16 %v957, %v957
  %v967 = vpack.c.bf16 %v958, %v958
  %v968 = vpack.c.bf16 %v959, %v959
  %v969 = vpack.c.bf16 %v960, %v960
  %v970 = vpack.c.bf16 %v961, %v961
  %v971 = vpack.c.bf16 %v962, %v962
  %s972 = scalar_lea.vmem %s1, 128
  %v973 = vld [vmem:[%s972] sm:$0xf]
  %v974 = vld [vmem:[%s972 + $0x4] sm:$0xf]
  %v975 = vld [vmem:[%s972 + $0x8] sm:$0xf]
  %v976 = vld [vmem:[%s972 + $0xc] sm:$0xf]
  %v977 = vld [vmem:[%s972 + $0x10] sm:$0xf]
  %v978 = vld [vmem:[%s972 + $0x14] sm:$0xf]
  %v979 = vld [vmem:[%s972 + $0x18] sm:$0xf]
  %v980 = vld [vmem:[%s972 + $0x1c] sm:$0xf]
  %v981 = vld [vmem:[%s972 + $0x20] sm:$0xf]
  %v982 = vld [vmem:[%s972 + $0x24] sm:$0xf]
  %v983 = vld [vmem:[%s972 + $0x28] sm:$0xf]
  %v984 = vld [vmem:[%s972 + $0x2c] sm:$0xf]
  %v985 = vld [vmem:[%s972 + $0x30] sm:$0xf]
  %v986 = vld [vmem:[%s972 + $0x34] sm:$0xf]
  %v987 = vld [vmem:[%s972 + $0x38] sm:$0xf]
  %v988 = vld [vmem:[%s972 + $0x3c] sm:$0xf]
  %v996 = vunpack.c.l.b16 %v963
  %v997 = vunpack.c.l.b16 %v964
  %v998 = vunpack.c.l.b16 %v965
  %v999 = vunpack.c.l.b16 %v966
  %v1000 = vunpack.c.l.b16 %v967
  %v1001 = vunpack.c.l.b16 %v968
  %v1002 = vunpack.c.l.b16 %v969
  %v1003 = vpack.c.b16 %v997, %v996
  %v1004 = vpack.c.b16 %v999, %v998
  %v1005 = vpack.c.b16 %v1001, %v1000
  %v1006 = vpack.c.b16 %v1002, %v1002
  %v1027 = vunpack.c.l.b16 %v973
  %v1028 = vunpack.c.l.b16 %v974
  %v1029 = vunpack.c.l.b16 %v975
  %v1030 = vunpack.c.l.b16 %v976
  %v1031 = vunpack.c.l.b16 %v977
  %v1032 = vunpack.c.l.b16 %v978
  %v1033 = vunpack.c.l.b16 %v979
  %v1034 = vunpack.c.l.b16 %v980
  %v1035 = vunpack.c.l.b16 %v981
  %v1036 = vunpack.c.l.b16 %v982
  %v1037 = vunpack.c.l.b16 %v983
  %v1038 = vunpack.c.l.b16 %v984
  %v1039 = vunpack.c.l.b16 %v985
  %v1040 = vunpack.c.l.b16 %v986
  %v1041 = vunpack.c.l.b16 %v987
  %v1042 = vunpack.c.l.b16 %v988
  %v1043 = vpack.c.b16 %v1028, %v1027
  %v1044 = vpack.c.b16 %v1030, %v1029
  %v1045 = vpack.c.b16 %v1032, %v1031
  %v1046 = vpack.c.b16 %v1034, %v1033
  %v1047 = vpack.c.b16 %v1036, %v1035
  %v1048 = vpack.c.b16 %v1038, %v1037
  %v1049 = vpack.c.b16 %v1040, %v1039
  %v1050 = vpack.c.b16 %v1042, %v1041
  %1059 = vmatprep.subr.bf16.mxu0 0
  %1060 = vmatpush1.bf16.msra.mxu0 %v1043
  %1061 = vmatprep.subr.bf16.mxu0 0
  %1062 = vmatpush1.bf16.msra.mxu0 %v1044
  %1063 = vmatprep.subr.bf16.mxu0 0
  %1064 = vmatpush1.bf16.msra.mxu0 %v1045
  %1065 = vmatprep.subr.bf16.mxu0 0
  %1066 = vmatpush1.bf16.msra.mxu0 %v1046
  %1067 = vmatprep.subr.bf16.mxu0 0
  %1068 = vmatpush1.bf16.msra.mxu0 %v1047
  %1069 = vmatprep.subr.bf16.mxu0 0
  %1070 = vmatpush1.bf16.msra.mxu0 %v1048
  %1071 = vmatprep.subr.bf16.mxu0 0
  %1072 = vmatpush1.bf16.msra.mxu0 %v1049
  %1073 = vmatprep.subr.bf16.mxu0 0
  %1074 = vmatpush1.bf16.msra.mxu0 %v1050
  %1075 = vmatprep.subr.bf16.mxu0 0
  %1076 = vmatpush1.bf16.msra.mxu0 0
  %1077 = vmatprep.subr.bf16.mxu0 0
  %1078 = vmatpush1.bf16.msra.mxu0 0
  %1079 = vmatprep.subr.bf16.mxu0 0
  %1080 = vmatpush1.bf16.msra.mxu0 0
  %1081 = vmatprep.subr.bf16.mxu0 0
  %1082 = vmatpush1.bf16.msra.mxu0 0
  %1083 = vmatprep.subr.bf16.mxu0 0
  %1084 = vmatpush1.bf16.msra.mxu0 0
  %1085 = vmatprep.subr.bf16.mxu0 0
  %1086 = vmatpush1.bf16.msra.mxu0 0
  %1087 = vmatprep.subr.bf16.mxu0 0
  %1088 = vmatpush1.bf16.msra.mxu0 0
  %1089 = vmatprep.subr.bf16.mxu0 0
  %1090 = vmatpush1.bf16.msra.mxu0 0
  %1091 = vmatprep.mubr.bf16.mxu0 0
  %1092 = vmatmul.mubr.bf16.gmra.mrb[0].mxu0 %v1003
  %v1093 = vpop.f32.mrb[0].mxu0
  %v1094 = vadd.f32 0.0, %v1093
  %v1095 = vpop.f32.mrb[0].mxu0
  %v1096 = vpop.f32.mrb[0].mxu0
  %v1097 = vadd.f32 0.0, %v1096
  %v1098 = vpop.f32.mrb[0].mxu0
  %1099 = vmatprep.mubr.bf16.mxu0 0
  %1100 = vmatmul.mubr.bf16.gmra.mrb[0].mxu0 %v1004
  %v1101 = vpop.f32.mrb[0].mxu0
  %v1102 = vadd.f32 0.0, %v1101
  %v1103 = vpop.f32.mrb[0].mxu0
  %v1104 = vpop.f32.mrb[0].mxu0
  %v1105 = vadd.f32 0.0, %v1104
  %v1106 = vpop.f32.mrb[0].mxu0
  %1107 = vmatprep.mubr.bf16.mxu0 0
  %1108 = vmatmul.mubr.bf16.gmra.mrb[0].mxu0 %v1005
  %v1109 = vpop.f32.mrb[0].mxu0
  %v1110 = vadd.f32 0.0, %v1109
  %v1111 = vpop.f32.mrb[0].mxu0
  %v1112 = vpop.f32.mrb[0].mxu0
  %v1113 = vadd.f32 0.0, %v1112
  %v1114 = vpop.f32.mrb[0].mxu0
  %1115 = vmatprep.mubr.bf16.mxu0 0
  %1116 = vmatmul.mubr.bf16.gmra.mrb[0].mxu0 %v1006
  %v1117 = vpop.f32.mrb[0].mxu0
  %v1118 = vadd.f32 0.0, %v1117
  %v1119 = vpop.f32.mrb[0].mxu0
  %v1120 = vpop.f32.mrb[0].mxu0
  %v1121 = vpop.f32.mrb[0].mxu0
  %1122 = vdwg.mxu0
  %v1123 = vadd.f32 %v937, %v1094
  %v1124 = vadd.f32 %v938, %v1097
  %v1125 = vadd.f32 %v939, %v1102
  %v1126 = vadd.f32 %v940, %v1105
  %v1127 = vadd.f32 %v941, %v1110
  %v1128 = vadd.f32 %v942, %v1113
  %v1129 = vadd.f32 %v943, %v1118
  %s1130 = scalar_lea.vmem %s1, 320
  %v1131 = vld [vmem:[%s1130] sm:$0xf]
  %v1132 = vld [vmem:[%s1130 + $0x4] sm:$0xf]
  %v1133 = vld [vmem:[%s1130 + $0x8] sm:$0xf]
  %v1134 = vld [vmem:[%s1130 + $0xc] sm:$0xf]
  %v1135 = vld [vmem:[%s1130 + $0x10] sm:$0xf]
  %v1136 = vld [vmem:[%s1130 + $0x14] sm:$0xf]
  %v1137 = vld [vmem:[%s1130 + $0x18] sm:$0xf]
  %v1138 = vld [vmem:[%s1130 + $0x1c] sm:$0xf]
  %v1139 = vld [vmem:[%s1130 + $0x20] sm:$0xf]
  %v1140 = vld [vmem:[%s1130 + $0x24] sm:$0xf]
  %v1141 = vld [vmem:[%s1130 + $0x28] sm:$0xf]
  %v1142 = vld [vmem:[%s1130 + $0x2c] sm:$0xf]
  %v1143 = vld [vmem:[%s1130 + $0x30] sm:$0xf]
  %v1144 = vld [vmem:[%s1130 + $0x34] sm:$0xf]
  %v1145 = vld [vmem:[%s1130 + $0x38] sm:$0xf]
  %v1146 = vld [vmem:[%s1130 + $0x3c] sm:$0xf]
  %v1148 = vunpack.c.l.b16 %v970
  %v1149 = vpack.c.b16 %v998, %v997
  %v1150 = vpack.c.b16 %v1000, %v999
  %v1151 = vpack.c.b16 %v1002, %v1001
  %v1152 = vpack.c.b16 %v1148, %v1148
  %v1173 = vunpack.c.l.b16 %v1131
  %v1174 = vunpack.c.l.b16 %v1132
  %v1175 = vunpack.c.l.b16 %v1133
  %v1176 = vunpack.c.l.b16 %v1134
  %v1177 = vunpack.c.l.b16 %v1135
  %v1178 = vunpack.c.l.b16 %v1136
  %v1179 = vunpack.c.l.b16 %v1137
  %v1180 = vunpack.c.l.b16 %v1138
  %v1181 = vunpack.c.l.b16 %v1139
  %v1182 = vunpack.c.l.b16 %v1140
  %v1183 = vunpack.c.l.b16 %v1141
  %v1184 = vunpack.c.l.b16 %v1142
  %v1185 = vunpack.c.l.b16 %v1143
  %v1186 = vunpack.c.l.b16 %v1144
  %v1187 = vunpack.c.l.b16 %v1145
  %v1188 = vunpack.c.l.b16 %v1146
  %v1189 = vpack.c.b16 %v1174, %v1173
  %v1190 = vpack.c.b16 %v1176, %v1175
  %v1191 = vpack.c.b16 %v1178, %v1177
  %v1192 = vpack.c.b16 %v1180, %v1179
  %v1193 = vpack.c.b16 %v1182, %v1181
  %v1194 = vpack.c.b16 %v1184, %v1183
  %v1195 = vpack.c.b16 %v1186, %v1185
  %v1196 = vpack.c.b16 %v1188, %v1187
  %1205 = vmatprep.subr.bf16.mxu0 0
  %1206 = vmatpush1.bf16.msra.mxu0 %v1189
  %1207 = vmatprep.subr.bf16.mxu0 0
  %1208 = vmatpush1.bf16.msra.mxu0 %v1190
  %1209 = vmatprep.subr.bf16.mxu0 0
  %1210 = vmatpush1.bf16.msra.mxu0 %v1191
  %1211 = vmatprep.subr.bf16.mxu0 0
  %1212 = vmatpush1.bf16.msra.mxu0 %v1192
  %1213 = vmatprep.subr.bf16.mxu0 0
  %1214 = vmatpush1.bf16.msra.mxu0 %v1193
  %1215 = vmatprep.subr.bf16.mxu0 0
  %1216 = vmatpush1.bf16.msra.mxu0 %v1194
  %1217 = vmatprep.subr.bf16.mxu0 0
  %1218 = vmatpush1.bf16.msra.mxu0 %v1195
  %1219 = vmatprep.subr.bf16.mxu0 0
  %1220 = vmatpush1.bf16.msra.mxu0 %v1196
  %1221 = vmatprep.subr.bf16.mxu0 0
  %1222 = vmatpush1.bf16.msra.mxu0 0
  %1223 = vmatprep.subr.bf16.mxu0 0
  %1224 = vmatpush1.bf16.msra.mxu0 0
  %1225 = vmatprep.subr.bf16.mxu0 0
  %1226 = vmatpush1.bf16.msra.mxu0 0
  %1227 = vmatprep.subr.bf16.mxu0 0
  %1228 = vmatpush1.bf16.msra.mxu0 0
  %1229 = vmatprep.subr.bf16.mxu0 0
  %1230 = vmatpush1.bf16.msra.mxu0 0
  %1231 = vmatprep.subr.bf16.mxu0 0
  %1232 = vmatpush1.bf16.msra.mxu0 0
  %1233 = vmatprep.subr.bf16.mxu0 0
  %1234 = vmatpush1.bf16.msra.mxu0 0
  %1235 = vmatprep.subr.bf16.mxu0 0
  %1236 = vmatpush1.bf16.msra.mxu0 0
  %1237 = vmatprep.mubr.bf16.mxu0 0
  %1238 = vmatmul.mubr.bf16.gmra.mrb[0].mxu0 %v1149
  %v1239 = vpop.f32.mrb[0].mxu0
  %v1240 = vadd.f32 0.0, %v1239
  %v1241 = vpop.f32.mrb[0].mxu0
  %v1242 = vpop.f32.mrb[0].mxu0
  %v1243 = vadd.f32 0.0, %v1242
  %v1244 = vpop.f32.mrb[0].mxu0
  %1245 = vmatprep.mubr.bf16.mxu0 0
  %1246 = vmatmul.mubr.bf16.gmra.mrb[0].mxu0 %v1150
  %v1247 = vpop.f32.mrb[0].mxu0
  %v1248 = vadd.f32 0.0, %v1247
  %v1249 = vpop.f32.mrb[0].mxu0
  %v1250 = vpop.f32.mrb[0].mxu0
  %v1251 = vadd.f32 0.0, %v1250
  %v1252 = vpop.f32.mrb[0].mxu0
  %1253 = vmatprep.mubr.bf16.mxu0 0
  %1254 = vmatmul.mubr.bf16.gmra.mrb[0].mxu0 %v1151
  %v1255 = vpop.f32.mrb[0].mxu0
  %v1256 = vadd.f32 0.0, %v1255
  %v1257 = vpop.f32.mrb[0].mxu0
  %v1258 = vpop.f32.mrb[0].mxu0
  %v1259 = vadd.f32 0.0, %v1258
  %v1260 = vpop.f32.mrb[0].mxu0
  %1261 = vmatprep.mubr.bf16.mxu0 0
  %1262 = vmatmul.mubr.bf16.gmra.mrb[0].mxu0 %v1152
  %v1263 = vpop.f32.mrb[0].mxu0
  %v1264 = vadd.f32 0.0, %v1263
  %v1265 = vpop.f32.mrb[0].mxu0
  %v1266 = vpop.f32.mrb[0].mxu0
  %v1267 = vpop.f32.mrb[0].mxu0
  %1268 = vdwg.mxu0
  %v1269 = vadd.f32 %v1123, %v1240
  %v1270 = vadd.f32 %v1124, %v1243
  %v1271 = vadd.f32 %v1125, %v1248
  %v1272 = vadd.f32 %v1126, %v1251
  %v1273 = vadd.f32 %v1127, %v1256
  %v1274 = vadd.f32 %v1128, %v1259
  %v1275 = vadd.f32 %v1129, %v1264
  %s1276 = scalar_lea.vmem %s1, 512
  %v1277 = vld [vmem:[%s1276] sm:$0xf]
  %v1278 = vld [vmem:[%s1276 + $0x4] sm:$0xf]
  %v1279 = vld [vmem:[%s1276 + $0x8] sm:$0xf]
  %v1280 = vld [vmem:[%s1276 + $0xc] sm:$0xf]
  %v1281 = vld [vmem:[%s1276 + $0x10] sm:$0xf]
  %v1282 = vld [vmem:[%s1276 + $0x14] sm:$0xf]
  %v1283 = vld [vmem:[%s1276 + $0x18] sm:$0xf]
  %v1284 = vld [vmem:[%s1276 + $0x1c] sm:$0xf]
  %v1285 = vld [vmem:[%s1276 + $0x20] sm:$0xf]
  %v1286 = vld [vmem:[%s1276 + $0x24] sm:$0xf]
  %v1287 = vld [vmem:[%s1276 + $0x28] sm:$0xf]
  %v1288 = vld [vmem:[%s1276 + $0x2c] sm:$0xf]
  %v1289 = vld [vmem:[%s1276 + $0x30] sm:$0xf]
  %v1290 = vld [vmem:[%s1276 + $0x34] sm:$0xf]
  %v1291 = vld [vmem:[%s1276 + $0x38] sm:$0xf]
  %v1292 = vld [vmem:[%s1276 + $0x3c] sm:$0xf]
  %v1294 = vunpack.c.l.b16 %v971
  %v1295 = vpack.c.b16 %v1148, %v1002
  %v1296 = vpack.c.b16 %v1294, %v1294
  %v1315 = vunpack.c.l.b16 %v1277
  %v1316 = vunpack.c.l.b16 %v1278
  %v1317 = vunpack.c.l.b16 %v1279
  %v1318 = vunpack.c.l.b16 %v1280
  %v1319 = vunpack.c.l.b16 %v1281
  %v1320 = vunpack.c.l.b16 %v1282
  %v1321 = vunpack.c.l.b16 %v1283
  %v1322 = vunpack.c.l.b16 %v1284
  %v1323 = vunpack.c.l.b16 %v1285
  %v1324 = vunpack.c.l.b16 %v1286
  %v1325 = vunpack.c.l.b16 %v1287
  %v1326 = vunpack.c.l.b16 %v1288
  %v1327 = vunpack.c.l.b16 %v1289
  %v1328 = vunpack.c.l.b16 %v1290
  %v1329 = vunpack.c.l.b16 %v1291
  %v1330 = vunpack.c.l.b16 %v1292
  %v1331 = vpack.c.b16 %v1316, %v1315
  %v1332 = vpack.c.b16 %v1318, %v1317
  %v1333 = vpack.c.b16 %v1320, %v1319
  %v1334 = vpack.c.b16 %v1322, %v1321
  %v1335 = vpack.c.b16 %v1324, %v1323
  %v1336 = vpack.c.b16 %v1326, %v1325
  %v1337 = vpack.c.b16 %v1328, %v1327
  %v1338 = vpack.c.b16 %v1330, %v1329
  %1347 = vmatprep.subr.bf16.mxu0 0
  %1348 = vmatpush1.bf16.msra.mxu0 %v1331
  %1349 = vmatprep.subr.bf16.mxu0 0
  %1350 = vmatpush1.bf16.msra.mxu0 %v1332
  %1351 = vmatprep.subr.bf16.mxu0 0
  %1352 = vmatpush1.bf16.msra.mxu0 %v1333
  %1353 = vmatprep.subr.bf16.mxu0 0
  %1354 = vmatpush1.bf16.msra.mxu0 %v1334
  %1355 = vmatprep.subr.bf16.mxu0 0
  %1356 = vmatpush1.bf16.msra.mxu0 %v1335
  %1357 = vmatprep.subr.bf16.mxu0 0
  %1358 = vmatpush1.bf16.msra.mxu0 %v1336
  %1359 = vmatprep.subr.bf16.mxu0 0
  %1360 = vmatpush1.bf16.msra.mxu0 %v1337
  %1361 = vmatprep.subr.bf16.mxu0 0
  %1362 = vmatpush1.bf16.msra.mxu0 %v1338
  %1363 = vmatprep.subr.bf16.mxu0 0
  %1364 = vmatpush1.bf16.msra.mxu0 0
  %1365 = vmatprep.subr.bf16.mxu0 0
  %1366 = vmatpush1.bf16.msra.mxu0 0
  %1367 = vmatprep.subr.bf16.mxu0 0
  %1368 = vmatpush1.bf16.msra.mxu0 0
  %1369 = vmatprep.subr.bf16.mxu0 0
  %1370 = vmatpush1.bf16.msra.mxu0 0
  %1371 = vmatprep.subr.bf16.mxu0 0
  %1372 = vmatpush1.bf16.msra.mxu0 0
  %1373 = vmatprep.subr.bf16.mxu0 0
  %1374 = vmatpush1.bf16.msra.mxu0 0
  %1375 = vmatprep.subr.bf16.mxu0 0
  %1376 = vmatpush1.bf16.msra.mxu0 0
  %1377 = vmatprep.subr.bf16.mxu0 0
  %1378 = vmatpush1.bf16.msra.mxu0 0
  %1379 = vmatprep.mubr.bf16.mxu0 0
  %1380 = vmatmul.mubr.bf16.gmra.mrb[0].mxu0 %v1004
  %v1381 = vpop.f32.mrb[0].mxu0
  %v1382 = vadd.f32 0.0, %v1381
  %v1383 = vpop.f32.mrb[0].mxu0
  %v1384 = vpop.f32.mrb[0].mxu0
  %v1385 = vadd.f32 0.0, %v1384
  %v1386 = vpop.f32.mrb[0].mxu0
  %1387 = vmatprep.mubr.bf16.mxu0 0
  %1388 = vmatmul.mubr.bf16.gmra.mrb[0].mxu0 %v1005
  %v1389 = vpop.f32.mrb[0].mxu0
  %v1390 = vadd.f32 0.0, %v1389
  %v1391 = vpop.f32.mrb[0].mxu0
  %v1392 = vpop.f32.mrb[0].mxu0
  %v1393 = vadd.f32 0.0, %v1392
  %v1394 = vpop.f32.mrb[0].mxu0
  %1395 = vmatprep.mubr.bf16.mxu0 0
  %1396 = vmatmul.mubr.bf16.gmra.mrb[0].mxu0 %v1295
  %v1397 = vpop.f32.mrb[0].mxu0
  %v1398 = vadd.f32 0.0, %v1397
  %v1399 = vpop.f32.mrb[0].mxu0
  %v1400 = vpop.f32.mrb[0].mxu0
  %v1401 = vadd.f32 0.0, %v1400
  %v1402 = vpop.f32.mrb[0].mxu0
  %1403 = vmatprep.mubr.bf16.mxu0 0
  %1404 = vmatmul.mubr.bf16.gmra.mrb[0].mxu0 %v1296
  %v1405 = vpop.f32.mrb[0].mxu0
  %v1406 = vadd.f32 0.0, %v1405
  %v1407 = vpop.f32.mrb[0].mxu0
  %v1408 = vpop.f32.mrb[0].mxu0
  %v1409 = vpop.f32.mrb[0].mxu0
  %1410 = vdwg.mxu0
  %v1411 = vadd.f32 %v1269, %v1382
  %v1412 = vadd.f32 %v1270, %v1385
  %v1413 = vadd.f32 %v1271, %v1390
  %v1414 = vadd.f32 %v1272, %v1393
  %v1415 = vadd.f32 %v1273, %v1398
  %v1416 = vadd.f32 %v1274, %v1401
  %v1417 = vadd.f32 %v1275, %v1406
  %1418 = vst [vmem:[%s2] sm:$0xff] %v1411
  %1419 = vst [vmem:[%s2 + $0x8] sm:$0xff] %v1412
  %1420 = vst [vmem:[%s2 + $0x10] sm:$0xff] %v1413
  %1421 = vst [vmem:[%s2 + $0x18] sm:$0xff] %v1414
  %1422 = vst [vmem:[%s2 + $0x20] sm:$0xff] %v1415
  %1423 = vst [vmem:[%s2 + $0x28] sm:$0xff] %v1416
  %1424 = vst [vmem:[%s2 + $0x30] sm:$0xff] %v1417
  // Predicated region
  $region10: #{_relu_conv2d_impl.1} parent=0 // pred_check
    _
  $region11: #{_relu_conv2d_impl.1} parent=0 // pred_check_branch
    %1426 = sbr.rel (0) target = $region13
  $region12: #{_relu_conv2d_impl.1} parent=0 // pred_region
    _
  $region13: #{_relu_conv2d_impl.1} parent=0 // pred_fallthru
    _
  // Predicated region
  $region14: #{_relu_conv2d_impl.1} parent=0 // pred_check
    _
  $region15: #{_relu_conv2d_impl.1} parent=0 // pred_check_branch
    %1428 = sbr.rel (0) target = $region17
  $region16: #{_relu_conv2d_impl.1} parent=0 // pred_region
    _
  $region17: #{_relu_conv2d_impl.1} parent=0 // pred_fallthru
    _

</llo_original>
